<compile_context>
chip_gen: v7x
topology: tpu7x:2x2x1
jax: 0.10.0
libtpu: 0.0.40
codegen_flags: <defaults>
</compile_context>

<pallas_src>
import jax
import jax.numpy as jnp
from jax.experimental import pallas as pl
from jax.experimental.pallas import tpu as pltpu


TILE_B_MAX = 512  # batch tile; ~0.5 MiB f32 intermediate per tile -> safe on v7x VMEM


def mlp_kernel(x_ref,
               w1_ref, b1_ref,
               w2_ref, b2_ref,
               w3_ref, b3_ref,
               w4_ref, b4_ref,
               o_ref):
    """Fused 4-layer MLP on one batch tile. Weights bf16, accumulation f32."""
    x = x_ref[...]  # (TILE_B, in_dim) f32

    # Layer 1: Linear + SiLU
    h = jnp.dot(x.astype(jnp.bfloat16), w1_ref[...],
                preferred_element_type=jnp.float32) + b1_ref[...]
    h = h * jax.nn.sigmoid(h)

    # Layer 2: Linear + SiLU
    h = jnp.dot(h.astype(jnp.bfloat16), w2_ref[...],
                preferred_element_type=jnp.float32) + b2_ref[...]
    h = h * jax.nn.sigmoid(h)

    # Layer 3: Linear + SiLU
    h = jnp.dot(h.astype(jnp.bfloat16), w3_ref[...],
                preferred_element_type=jnp.float32) + b3_ref[...]
    h = h * jax.nn.sigmoid(h)

    # Layer 4: Linear + Sigmoid
    y = jnp.dot(h.astype(jnp.bfloat16), w4_ref[...],
                preferred_element_type=jnp.float32) + b4_ref[...]
    o_ref[...] = jax.nn.sigmoid(y).astype(o_ref.dtype)


def simple_model_forward(x, params, tile_b_max=TILE_B_MAX):
    """x: [B, input_dim] float32 -> [B, output_dim] float32."""
    (w1, b1), (w2, b2), (w3, b3), (w4, b4) = params
    B, in_dim = x.shape
    out_dim = w4.shape[1]

    # Pad batch to a multiple of 8 (sublane tile), then to a multiple of the tile.
    b8 = ((B + 7) // 8) * 8
    tile_b = min(tile_b_max, b8)
    b_pad = ((b8 + tile_b - 1) // tile_b) * tile_b
    if b_pad != B:
        x = jnp.pad(x, ((0, b_pad - B), (0, 0)))

    grid = (b_pad // tile_b,)

    # Batch-tiled specs for x / out; constant-index specs keep weights VMEM-resident.
    x_spec = pl.BlockSpec((tile_b, in_dim), lambda i: (i, 0))
    out_spec = pl.BlockSpec((tile_b, out_dim), lambda i: (i, 0))
    const = lambda a: pl.BlockSpec(a.shape, lambda i: (0,) * a.ndim)

    weights = (w1, b1, w2, b2, w3, b3, w4, b4)

    out = pl.pallas_call(
        mlp_kernel,
        out_shape=jax.ShapeDtypeStruct((b_pad, out_dim), jnp.float32),
        grid=grid,
        in_specs=[x_spec] + [const(a) for a in weights],
        out_specs=out_spec,
        compiler_params=pltpu.CompilerParams(
            dimension_semantics=("parallel",)),
    )(x, *weights)

    return out[:B]


def init_params(key, input_dim=8, hidden_dim=256, output_dim=8):
    """Init matching PyTorch nn.Linear default (uniform +-1/sqrt(fan_in)).

    Weights stored (in, out) in bfloat16; biases (1, out) in float32.
    """
    dims = [(input_dim, hidden_dim),
            (hidden_dim, hidden_dim),
            (hidden_dim, hidden_dim),
            (hidden_dim, output_dim)]
    params = []
    for (fan_in, fan_out) in dims:
        key, kw, kb = jax.random.split(key, 3)
        bound = 1.0 / jnp.sqrt(fan_in)
        w = jax.random.uniform(kw, (fan_in, fan_out), jnp.float32, -bound, bound)
        b = jax.random.uniform(kb, (1, fan_out), jnp.float32, -bound, bound)
        params.append((w.astype(jnp.bfloat16), b))
    return params


def reference_forward_bf16(x, params):
    """Pure-JAX reference mimicking the kernel's bf16-dot / f32-accumulate math."""
    h = x
    for i, (w, b) in enumerate(params):
        h = jnp.dot(h.astype(jnp.bfloat16), w,
                    preferred_element_type=jnp.float32) + b
        if i < 3:
            h = h * jax.nn.sigmoid(h)   # SiLU
        else:
            h = jax.nn.sigmoid(h)       # final Sigmoid
    return h


def reference_forward_f32(x, params):
    """Full-f32 reference (original module semantics) for a looser sanity check."""
    h = x
    for i, (w, b) in enumerate(params):
        h = h @ w.astype(jnp.float32) + b
        if i < 3:
            h = h * jax.nn.sigmoid(h)
        else:
            h = jax.nn.sigmoid(h)
    return h


if __name__ == "__main__":
    key = jax.random.PRNGKey(0)
    kp, kx, kx2 = jax.random.split(key, 3)

    input_dim, hidden_dim, output_dim = 8, 256, 8
    batch = 4

    params = init_params(kp, input_dim, hidden_dim, output_dim)
    x = jax.random.normal(kx, (batch, input_dim), jnp.float32)

    out = simple_model_forward(x, params)
    out = jax.block_until_ready(out)
    assert out.shape == (batch, output_dim)

    # Strict check against a reference doing identical bf16-dot math.
    ref_bf16 = reference_forward_bf16(x, params)
    assert jnp.allclose(out, ref_bf16, atol=1e-5, rtol=1e-5), "mismatch vs bf16 reference"

    # Loose check against the full-f32 module semantics (bf16 rounding only).
    ref_f32 = reference_forward_f32(x, params)
    assert jnp.allclose(out, ref_f32, atol=3e-2, rtol=3e-2), "mismatch vs f32 reference"

    # Exercise the batch grid (multiple tiles + padding path).
    big_batch = 1200
    xb = jax.random.normal(kx2, (big_batch, input_dim), jnp.float32)
    out_big = jax.block_until_ready(simple_model_forward(xb, params))
    assert out_big.shape == (big_batch, output_dim)
    assert jnp.allclose(out_big, reference_forward_bf16(xb, params),
                        atol=1e-5, rtol=1e-5), "mismatch vs reference (big batch)"

    print("KERNEL_OK")
</pallas_src>

<mosaic_0001>
module attributes {stable_mosaic.version = 11 : i64} {
  func.func @mlp_kernel(%arg0: i32, %arg1: memref<8x8xf32, #tpu.memory_space<vmem>>, %arg2: memref<8x256xbf16, #tpu.memory_space<vmem>>, %arg3: memref<1x256xf32, #tpu.memory_space<vmem>>, %arg4: memref<256x256xbf16, #tpu.memory_space<vmem>>, %arg5: memref<1x256xf32, #tpu.memory_space<vmem>>, %arg6: memref<256x256xbf16, #tpu.memory_space<vmem>>, %arg7: memref<1x256xf32, #tpu.memory_space<vmem>>, %arg8: memref<256x8xbf16, #tpu.memory_space<vmem>>, %arg9: memref<1x8xf32, #tpu.memory_space<vmem>>, %arg10: memref<8x8xf32, #tpu.memory_space<vmem>>) attributes {dimension_semantics = [#tpu.dimension_semantics<parallel>], iteration_bounds = array<i64: 1>, scalar_prefetch = 0 : i64, scratch_operands = 0 : i64, tpu.core_type = #tpu.core_type<tc>, window_params = [{transform_indices = @transform_0, window_bounds = array<i64: 8, 8>}, {pipeline_mode = #tpu.pipeline_mode<synchronous>, transform_indices = @transform_1, window_bounds = array<i64: 8, 256>}, {pipeline_mode = #tpu.pipeline_mode<synchronous>, transform_indices = @transform_2, window_bounds = array<i64: 1, 256>}, {pipeline_mode = #tpu.pipeline_mode<synchronous>, transform_indices = @transform_3, window_bounds = array<i64: 256, 256>}, {pipeline_mode = #tpu.pipeline_mode<synchronous>, transform_indices = @transform_4, window_bounds = array<i64: 1, 256>}, {pipeline_mode = #tpu.pipeline_mode<synchronous>, transform_indices = @transform_5, window_bounds = array<i64: 256, 256>}, {pipeline_mode = #tpu.pipeline_mode<synchronous>, transform_indices = @transform_6, window_bounds = array<i64: 1, 256>}, {pipeline_mode = #tpu.pipeline_mode<synchronous>, transform_indices = @transform_7, window_bounds = array<i64: 256, 8>}, {pipeline_mode = #tpu.pipeline_mode<synchronous>, transform_indices = @transform_8, window_bounds = array<i64: 1, 8>}, {transform_indices = @transform_9, window_bounds = array<i64: 8, 8>}]} {
    %c0 = arith.constant 0 : index
    %c0_0 = arith.constant 0 : index
    %0 = vector.load %arg1[%c0, %c0_0] : memref<8x8xf32, #tpu.memory_space<vmem>>, vector<8x8xf32>
    %1 = arith.truncf %0 : vector<8x8xf32> to vector<8x8xbf16>
    %c0_1 = arith.constant 0 : index
    %c0_2 = arith.constant 0 : index
    %2 = vector.load %arg2[%c0_1, %c0_2] : memref<8x256xbf16, #tpu.memory_space<vmem>>, vector<8x256xbf16>
    %cst = arith.constant dense<0.000000e+00> : vector<8x256xf32>
    %3 = tpu.matmul %1, %2, %cst {dimension_numbers = #tpu.dot_dimension_numbers<[1], [0], [0], [1], [0, 0, 1, 1], [], []>} : vector<8x8xbf16>, vector<8x256xbf16>, vector<8x256xf32> -> vector<8x256xf32>
    %c0_3 = arith.constant 0 : index
    %c0_4 = arith.constant 0 : index
    %4 = vector.load %arg3[%c0_3, %c0_4] : memref<1x256xf32, #tpu.memory_space<vmem>>, vector<1x256xf32>
    %5 = vector.broadcast %4 : vector<1x256xf32> to vector<8x256xf32>
    %6 = arith.addf %3, %5 : vector<8x256xf32>
    %7 = arith.negf %6 : vector<8x256xf32>
    %8 = math.exp %7 : vector<8x256xf32>
    %cst_5 = arith.constant 1.000000e+00 : f32
    %9 = vector.broadcast %cst_5 : f32 to vector<8x256xf32>
    %10 = arith.addf %9, %8 : vector<8x256xf32>
    %11 = arith.divf %9, %10 : vector<8x256xf32>
    %12 = arith.mulf %6, %11 : vector<8x256xf32>
    %13 = arith.truncf %12 : vector<8x256xf32> to vector<8x256xbf16>
    %c0_6 = arith.constant 0 : index
    %c0_7 = arith.constant 0 : index
    %14 = vector.load %arg4[%c0_6, %c0_7] : memref<256x256xbf16, #tpu.memory_space<vmem>>, vector<256x256xbf16>
    %cst_8 = arith.constant dense<0.000000e+00> : vector<8x256xf32>
    %15 = tpu.matmul %13, %14, %cst_8 {dimension_numbers = #tpu.dot_dimension_numbers<[1], [0], [0], [1], [0, 0, 1, 1], [], []>} : vector<8x256xbf16>, vector<256x256xbf16>, vector<8x256xf32> -> vector<8x256xf32>
    %c0_9 = arith.constant 0 : index
    %c0_10 = arith.constant 0 : index
    %16 = vector.load %arg5[%c0_9, %c0_10] : memref<1x256xf32, #tpu.memory_space<vmem>>, vector<1x256xf32>
    %17 = vector.broadcast %16 : vector<1x256xf32> to vector<8x256xf32>
    %18 = arith.addf %15, %17 : vector<8x256xf32>
    %19 = arith.negf %18 : vector<8x256xf32>
    %20 = math.exp %19 : vector<8x256xf32>
    %cst_11 = arith.constant 1.000000e+00 : f32
    %21 = vector.broadcast %cst_11 : f32 to vector<8x256xf32>
    %22 = arith.addf %21, %20 : vector<8x256xf32>
    %23 = arith.divf %21, %22 : vector<8x256xf32>
    %24 = arith.mulf %18, %23 : vector<8x256xf32>
    %25 = arith.truncf %24 : vector<8x256xf32> to vector<8x256xbf16>
    %c0_12 = arith.constant 0 : index
    %c0_13 = arith.constant 0 : index
    %26 = vector.load %arg6[%c0_12, %c0_13] : memref<256x256xbf16, #tpu.memory_space<vmem>>, vector<256x256xbf16>
    %cst_14 = arith.constant dense<0.000000e+00> : vector<8x256xf32>
    %27 = tpu.matmul %25, %26, %cst_14 {dimension_numbers = #tpu.dot_dimension_numbers<[1], [0], [0], [1], [0, 0, 1, 1], [], []>} : vector<8x256xbf16>, vector<256x256xbf16>, vector<8x256xf32> -> vector<8x256xf32>
    %c0_15 = arith.constant 0 : index
    %c0_16 = arith.constant 0 : index
    %28 = vector.load %arg7[%c0_15, %c0_16] : memref<1x256xf32, #tpu.memory_space<vmem>>, vector<1x256xf32>
    %29 = vector.broadcast %28 : vector<1x256xf32> to vector<8x256xf32>
    %30 = arith.addf %27, %29 : vector<8x256xf32>
    %31 = arith.negf %30 : vector<8x256xf32>
    %32 = math.exp %31 : vector<8x256xf32>
    %cst_17 = arith.constant 1.000000e+00 : f32
    %33 = vector.broadcast %cst_17 : f32 to vector<8x256xf32>
    %34 = arith.addf %33, %32 : vector<8x256xf32>
    %35 = arith.divf %33, %34 : vector<8x256xf32>
    %36 = arith.mulf %30, %35 : vector<8x256xf32>
    %37 = arith.truncf %36 : vector<8x256xf32> to vector<8x256xbf16>
    %c0_18 = arith.constant 0 : index
    %c0_19 = arith.constant 0 : index
    %38 = vector.load %arg8[%c0_18, %c0_19] : memref<256x8xbf16, #tpu.memory_space<vmem>>, vector<256x8xbf16>
    %cst_20 = arith.constant dense<0.000000e+00> : vector<8x8xf32>
    %39 = tpu.matmul %37, %38, %cst_20 {dimension_numbers = #tpu.dot_dimension_numbers<[1], [0], [0], [1], [0, 0, 1, 1], [], []>} : vector<8x256xbf16>, vector<256x8xbf16>, vector<8x8xf32> -> vector<8x8xf32>
    %c0_21 = arith.constant 0 : index
    %c0_22 = arith.constant 0 : index
    %40 = vector.load %arg9[%c0_21, %c0_22] : memref<1x8xf32, #tpu.memory_space<vmem>>, vector<1x8xf32>
    %41 = vector.broadcast %40 : vector<1x8xf32> to vector<8x8xf32>
    %42 = arith.addf %39, %41 : vector<8x8xf32>
    %43 = arith.negf %42 : vector<8x8xf32>
    %44 = math.exp %43 : vector<8x8xf32>
    %cst_23 = arith.constant 1.000000e+00 : f32
    %45 = vector.broadcast %cst_23 : f32 to vector<8x8xf32>
    %46 = arith.addf %45, %44 : vector<8x8xf32>
    %47 = arith.divf %45, %46 : vector<8x8xf32>
    %c0_24 = arith.constant 0 : index
    %c0_25 = arith.constant 0 : index
    %48 = vector.load %arg10[%c0_24, %c0_25] : memref<8x8xf32, #tpu.memory_space<vmem>>, vector<8x8xf32>
    tpu.vector_store %arg10[%c0_24, %c0_25], %47 {strides = array<i32>} : memref<8x8xf32, #tpu.memory_space<vmem>>, vector<8x8xf32>,
    return
  }
  func.func @transform_0(%arg0: i32) -> (i32, i32) {
    %c0_i32 = arith.constant 0 : i32
    %c0_i32_0 = arith.constant 0 : i32
    return %arg0, %c0_i32 : i32, i32
  }
  func.func @transform_1(%arg0: i32) -> (i32, i32) {
    %c0_i32 = arith.constant 0 : i32
    %c0_i32_0 = arith.constant 0 : i32
    %c0_i32_1 = arith.constant 0 : i32
    return %c0_i32, %c0_i32_0 : i32, i32
  }
  func.func @transform_2(%arg0: i32) -> (i32, i32) {
    %c0_i32 = arith.constant 0 : i32
    %c0_i32_0 = arith.constant 0 : i32
    %c0_i32_1 = arith.constant 0 : i32
    return %c0_i32, %c0_i32_0 : i32, i32
  }
  func.func @transform_3(%arg0: i32) -> (i32, i32) {
    %c0_i32 = arith.constant 0 : i32
    %c0_i32_0 = arith.constant 0 : i32
    %c0_i32_1 = arith.constant 0 : i32
    return %c0_i32, %c0_i32_0 : i32, i32
  }
  func.func @transform_4(%arg0: i32) -> (i32, i32) {
    %c0_i32 = arith.constant 0 : i32
    %c0_i32_0 = arith.constant 0 : i32
    %c0_i32_1 = arith.constant 0 : i32
    return %c0_i32, %c0_i32_0 : i32, i32
  }
  func.func @transform_5(%arg0: i32) -> (i32, i32) {
    %c0_i32 = arith.constant 0 : i32
    %c0_i32_0 = arith.constant 0 : i32
    %c0_i32_1 = arith.constant 0 : i32
    return %c0_i32, %c0_i32_0 : i32, i32
  }
  func.func @transform_6(%arg0: i32) -> (i32, i32) {
    %c0_i32 = arith.constant 0 : i32
    %c0_i32_0 = arith.constant 0 : i32
    %c0_i32_1 = arith.constant 0 : i32
    return %c0_i32, %c0_i32_0 : i32, i32
  }
  func.func @transform_7(%arg0: i32) -> (i32, i32) {
    %c0_i32 = arith.constant 0 : i32
    %c0_i32_0 = arith.constant 0 : i32
    %c0_i32_1 = arith.constant 0 : i32
    return %c0_i32, %c0_i32_0 : i32, i32
  }
  func.func @transform_8(%arg0: i32) -> (i32, i32) {
    %c0_i32 = arith.constant 0 : i32
    %c0_i32_0 = arith.constant 0 : i32
    %c0_i32_1 = arith.constant 0 : i32
    return %c0_i32, %c0_i32_0 : i32, i32
  }
  func.func @transform_9(%arg0: i32) -> (i32, i32) {
    %c0_i32 = arith.constant 0 : i32
    %c0_i32_0 = arith.constant 0 : i32
    return %arg0, %c0_i32 : i32, i32
  }
}

</mosaic_0001>

<llo_original>
// kernel: tpu_custom_call.1
$region0: #{tpu_custom_call.1}
  #allocation0 [shape = 'u32[]', space=smem, size = 0x4, offset = 0x4, fixed_abs, tag = 'smem constant byte address 0x4 - core index']
  #allocation1 [shape = 'u32[144,128]{1,0:T(1,128)}', space=vmem, size = 0x12000, scoped, tag = 'internal scratch']
  %s0 = inlined_call_operand.vmem [shape: f32[8,8], index: 0, kind: input, shape index: {}]
  %s1 = inlined_call_operand.vmem [shape: bf16[8,256], index: 1, kind: input, shape index: {}]
  %s2 = inlined_call_operand.vmem [shape: f32[1,256], index: 2, kind: input, shape index: {}]
  %s3 = inlined_call_operand.hbm [shape: bf16[256,256], index: 3, kind: input, shape index: {}]
  %s4 = inlined_call_operand.vmem [shape: f32[1,256], index: 4, kind: input, shape index: {}]
  %s5 = inlined_call_operand.hbm [shape: bf16[256,256], index: 5, kind: input, shape index: {}]
  %s6 = inlined_call_operand.vmem [shape: f32[1,256], index: 6, kind: input, shape index: {}]
  %s7 = inlined_call_operand.vmem [shape: bf16[256,8], index: 7, kind: input, shape index: {}]
  %s8 = inlined_call_operand.vmem [shape: f32[1,8], index: 8, kind: input, shape index: {}]
  %s9 = inlined_call_operand.hbm [shape: f32[8,8], index: 9, kind: output, shape index: {}]
  %s10 = sld [smem:[#allocation0]]
  $region54: #{tpu_custom_call.1} parent=0
    _
  %s12 = ssub.s32 1, %s10
  %s13 = scalar_select 0, %s12, %s10
  $region1: #{tpu_custom_call.1} parent=0
    #allocation2 [shape = 'u8[131072]{0}', space=vmem, size = 0x20000, scoped, tag = 'input window, operand 3, single buffered']
    #allocation3 [shape = 's32[1]{0}', space=sflag, size = 0x4, scoped, tag = 'scoped memory for tpu_custom_call.1']
    #allocation4 [shape = 's32[1]{0}', space=sflag, size = 0x4, scoped, tag = 'scoped memory for tpu_custom_call.1']
    #allocation5 [shape = 'u8[131072]{0}', space=vmem, size = 0x20000, scoped, tag = 'input window, operand 5, single buffered']
    #allocation6 [shape = 's32[1]{0}', space=sflag, size = 0x4, scoped, tag = 'scoped memory for tpu_custom_call.1']
    #allocation7 [shape = 'u8[4096]{0}', space=vmem, size = 0x1000, scoped, tag = 'output window, operand 0, single buffered']
    %14 = vsyncpa [#allocation3], 0
    %15 = vsyncpa [#allocation6], 0
    %16 = vsyncpa [#allocation4], 0
    // Predicated region
    $region2: #{tpu_custom_call.1} parent=1 // pred_check
      _
    $region3: #{tpu_custom_call.1} parent=1 // pred_check_branch
      %18 = sbr.rel (0) target = $region5
    $region4: #{tpu_custom_call.1} parent=1 // pred_region
      _
    $region5: #{tpu_custom_call.1} parent=1 // pred_fallthru
      _
    // Predicated region
    $region6: #{tpu_custom_call.1} parent=1 // pred_check
      _
    $region7: #{tpu_custom_call.1} parent=1 // pred_check_branch
      %20 = sbr.rel (0) target = $region9
    $region8: #{tpu_custom_call.1} parent=1 // pred_region
      _
    $region9: #{tpu_custom_call.1} parent=1 // pred_fallthru
      _
    // Predicated region
    $region10: #{tpu_custom_call.1} parent=1 // pred_check
      _
    $region11: #{tpu_custom_call.1} parent=1 // pred_check_branch
      %22 = sbr.rel (0) target = $region13
    $region12: #{tpu_custom_call.1} parent=1 // pred_region
      _
    $region13: #{tpu_custom_call.1} parent=1 // pred_fallthru
      _
    // Predicated region
    $region14: #{tpu_custom_call.1} parent=1 // pred_check
      _
    $region15: #{tpu_custom_call.1} parent=1 // pred_check_branch
      %24 = sbr.rel (0) target = $region17
    $region16: #{tpu_custom_call.1} parent=1 // pred_region
      %s26 = ssub.s32 4096, 4096
      %27 = vsyncadd [#allocation3], %s26
      %s28 = sshll.u32 [#allocation2], 4
      %s29 = int_to_ptr.vmem [resolvable:$true] %s28
      %34 = dma.hbm_to_vmem [thread:$0]  %s3, 4096, %s29, [#allocation3], 128, 128, 8
    $region17: #{tpu_custom_call.1} parent=1 // pred_fallthru
      _
    // Predicated region
    $region18: #{tpu_custom_call.1} parent=1 // pred_check
      _
    $region19: #{tpu_custom_call.1} parent=1 // pred_check_branch
      %36 = sbr.rel (0) target = $region21
    $region20: #{tpu_custom_call.1} parent=1 // pred_region
      _
    $region21: #{tpu_custom_call.1} parent=1 // pred_fallthru
      _
    // Predicated region
    $region22: #{tpu_custom_call.1} parent=1 // pred_check
      _
    $region23: #{tpu_custom_call.1} parent=1 // pred_check_branch
      %38 = sbr.rel (0) target = $region25
    $region24: #{tpu_custom_call.1} parent=1 // pred_region
      %s40 = ssub.s32 4096, 4096
      %41 = vsyncadd [#allocation6], %s40
      %s42 = sshll.u32 [#allocation5], 4
      %s43 = int_to_ptr.vmem [resolvable:$true] %s42
      %48 = dma.hbm_to_vmem [thread:$0]  %s5, 4096, %s43, [#allocation6], 128, 128, 8
    $region25: #{tpu_custom_call.1} parent=1 // pred_fallthru
      _
    // Predicated region
    $region26: #{tpu_custom_call.1} parent=1 // pred_check
      _
    $region27: #{tpu_custom_call.1} parent=1 // pred_check_branch
      %50 = sbr.rel (0) target = $region29
    $region28: #{tpu_custom_call.1} parent=1 // pred_region
      _
    $region29: #{tpu_custom_call.1} parent=1 // pred_fallthru
      _
    // Predicated region
    $region30: #{tpu_custom_call.1} parent=1 // pred_check
      _
    $region31: #{tpu_custom_call.1} parent=1 // pred_check_branch
      %52 = sbr.rel (0) target = $region33
    $region32: #{tpu_custom_call.1} parent=1 // pred_region
      _
    $region33: #{tpu_custom_call.1} parent=1 // pred_fallthru
      _
    // Predicated region
    $region34: #{tpu_custom_call.1} parent=1 // pred_check
      _
    $region35: #{tpu_custom_call.1} parent=1 // pred_check_branch
      %54 = sbr.rel (0) target = $region37
    $region36: #{tpu_custom_call.1} parent=1 // pred_region
      _
    $region37: #{tpu_custom_call.1} parent=1 // pred_fallthru
      _
    // Predicated region
    $region38: #{tpu_custom_call.1} parent=1 // pred_check
      _
    $region39: #{tpu_custom_call.1} parent=1 // pred_check_branch
      %56 = sbr.rel (0) target = $region41
    $region40: #{tpu_custom_call.1} parent=1 // pred_region
      %57 = dma.done [#allocation3], 4096
    $region41: #{tpu_custom_call.1} parent=1 // pred_fallthru
      _
    // Predicated region
    $region42: #{tpu_custom_call.1} parent=1 // pred_check
      _
    $region43: #{tpu_custom_call.1} parent=1 // pred_check_branch
      %59 = sbr.rel (0) target = $region45
    $region44: #{tpu_custom_call.1} parent=1 // pred_region
      %60 = dma.done [#allocation6], 4096
    $region45: #{tpu_custom_call.1} parent=1 // pred_fallthru
      _
    %v62 = vld [vmem:[%s0] sm:$0xff]
    %v63 = vpack.c.bf16 %v62, %v62
    %v64 = vld [vmem:[%s1] sm:$0xff]
    %v65 = vld [vmem:[%s2] sm:$0x3]
    %v67 = vlaneseq
    %v68 = vshrl.u32 %v67, 7
    %v69 = vsub.s32 0, %v68
    %v70 = vrot.slane %v65, %v69
    %v71 = vlaneseq
    %v72 = vshrl.u32 %v71, 7
    %v73 = vsub.s32 1, %v72
    %v74 = vrot.slane %v65, %v73
    %v78 = vunpack.c.l.b16 %v64
    %v79 = vunpack.c.h.b16 %v64
    %v80 = vpack.c.b16 %v78, %v78
    %v81 = vpack.c.b16 %v79, %v79
    %vm82 = vcmask 64512
    %v84 = vsel %vm82, %v63, 0
    %vm86 = vcmask 1043456
    %v88 = vsel %vm86, %v80, 0
    %v91 = vsel %vm86, %v81, 0
    %93 = vmatprep.subr.bf16.mxu0 %v91
    %94 = vmatpush1.bf16.msra.mxu0 %v88
    %95 = vmatprep.subr.bf16.mxu0 0
    %96 = vmatpush1.bf16.msra.mxu0 0
    %97 = vmatprep.subr.bf16.mxu0 0
    %98 = vmatpush1.bf16.msra.mxu0 0
    %99 = vmatprep.subr.bf16.mxu0 0
    %100 = vmatpush1.bf16.msra.mxu0 0
    %101 = vmatprep.subr.bf16.mxu0 0
    %102 = vmatpush1.bf16.msra.mxu0 0
    %103 = vmatprep.subr.bf16.mxu0 0
    %104 = vmatpush1.bf16.msra.mxu0 0
    %105 = vmatprep.subr.bf16.mxu0 0
    %106 = vmatpush1.bf16.msra.mxu0 0
    %107 = vmatprep.subr.bf16.mxu0 0
    %108 = vmatpush1.bf16.msra.mxu0 0
    %109 = vmatprep.subr.bf16.mxu0 0
    %110 = vmatpush1.bf16.msra.mxu0 0
    %111 = vmatprep.subr.bf16.mxu0 0
    %112 = vmatpush1.bf16.msra.mxu0 0
    %113 = vmatprep.subr.bf16.mxu0 0
    %114 = vmatpush1.bf16.msra.mxu0 0
    %115 = vmatprep.subr.bf16.mxu0 0
    %116 = vmatpush1.bf16.msra.mxu0 0
    %117 = vmatprep.subr.bf16.mxu0 0
    %118 = vmatpush1.bf16.msra.mxu0 0
    %119 = vmatprep.subr.bf16.mxu0 0
    %120 = vmatpush1.bf16.msra.mxu0 0
    %121 = vmatprep.subr.bf16.mxu0 0
    %122 = vmatpush1.bf16.msra.mxu0 0
    %123 = vmatprep.subr.bf16.mxu0 0
    %124 = vmatpush1.bf16.msra.mxu0 0
    %125 = vmatprep.mubr.bf16.mxu0 0
    %126 = vmatmul.mubr.bf16.gmra.mrb[0].mxu0 %v84
    %v127 = vpop.f32.mrb[0].mxu0
    %v128 = vadd.f32 %v70, %v127
    %v129 = vpop.f32.mrb[0].mxu0
    %v130 = vadd.f32 %v74, %v129
    %v131 = vpop.f32.mrb[0].mxu0
    %v132 = vpop.f32.mrb[0].mxu0
    %133 = vdwg.mxu0
    %v134 = vxor.u32 %v128, 2147483648
    %v135 = vxor.u32 %v130, 2147483648
    %v136 = vmul.f32 %v134, 1.442695
    %v137 = vpow.pop %v136
    %v138 = vmul.f32 %v135, 1.442695
    %v139 = vpow.pop %v138
    %v140 = vadd.f32 %v137, 1.0
    %v141 = vadd.f32 %v139, 1.0
    %v142 = vrcp.pop %v140
    %v143 = vmul.f32 1.0, %v142
    %v144 = vrcp.pop %v141
    %v145 = vmul.f32 1.0, %v144
    %v146 = vmul.f32 %v128, %v143
    %v147 = vmul.f32 %v130, %v145
    %v148 = vpack.c.bf16 %v146, %v146
    %v149 = vpack.c.bf16 %v147, %v147
    %v150 = vld [vmem:[#allocation2] sm:$0xff]
    %v151 = vld [vmem:[#allocation2 + $0x8] sm:$0xff]
    %v152 = vld [vmem:[#allocation2 + $0x10] sm:$0xff]
    %v153 = vld [vmem:[#allocation2 + $0x18] sm:$0xff]
    %v154 = vld [vmem:[#allocation2 + $0x20] sm:$0xff]
    %v155 = vld [vmem:[#allocation2 + $0x28] sm:$0xff]
    %v156 = vld [vmem:[#allocation2 + $0x30] sm:$0xff]
    %v157 = vld [vmem:[#allocation2 + $0x38] sm:$0xff]
    %v158 = vld [vmem:[#allocation2 + $0x40] sm:$0xff]
    %v159 = vld [vmem:[#allocation2 + $0x48] sm:$0xff]
    %v160 = vld [vmem:[#allocation2 + $0x50] sm:$0xff]
    %v161 = vld [vmem:[#allocation2 + $0x58] sm:$0xff]
    %v162 = vld [vmem:[#allocation2 + $0x60] sm:$0xff]
    %v163 = vld [vmem:[#allocation2 + $0x68] sm:$0xff]
    %v164 = vld [vmem:[#allocation2 + $0x70] sm:$0xff]
    %v165 = vld [vmem:[#allocation2 + $0x78] sm:$0xff]
    %v166 = vld [vmem:[#allocation2 + $0x80] sm:$0xff]
    %v167 = vld [vmem:[#allocation2 + $0x88] sm:$0xff]
    %v168 = vld [vmem:[#allocation2 + $0x90] sm:$0xff]
    %v169 = vld [vmem:[#allocation2 + $0x98] sm:$0xff]
    %v170 = vld [vmem:[#allocation2 + $0xa0] sm:$0xff]
    %v171 = vld [vmem:[#allocation2 + $0xa8] sm:$0xff]
    %v172 = vld [vmem:[#allocation2 + $0xb0] sm:$0xff]
    %v173 = vld [vmem:[#allocation2 + $0xb8] sm:$0xff]
    %v174 = vld [vmem:[#allocation2 + $0xc0] sm:$0xff]
    %v175 = vld [vmem:[#allocation2 + $0xc8] sm:$0xff]
    %v176 = vld [vmem:[#allocation2 + $0xd0] sm:$0xff]
    %v177 = vld [vmem:[#allocation2 + $0xd8] sm:$0xff]
    %v178 = vld [vmem:[#allocation2 + $0xe0] sm:$0xff]
    %v179 = vld [vmem:[#allocation2 + $0xe8] sm:$0xff]
    %v180 = vld [vmem:[#allocation2 + $0xf0] sm:$0xff]
    %v181 = vld [vmem:[#allocation2 + $0xf8] sm:$0xff]
    %v182 = vld [vmem:[%s4] sm:$0x3]
    %v184 = vlaneseq
    %v185 = vshrl.u32 %v184, 7
    %v186 = vsub.s32 0, %v185
    %v187 = vrot.slane %v182, %v186
    %v188 = vlaneseq
    %v189 = vshrl.u32 %v188, 7
    %v190 = vsub.s32 1, %v189
    %v191 = vrot.slane %v182, %v190
    %v226 = vunpack.c.l.b16 %v150
    %v227 = vunpack.c.h.b16 %v150
    %v228 = vunpack.c.l.b16 %v151
    %v229 = vunpack.c.h.b16 %v151
    %v230 = vunpack.c.l.b16 %v152
    %v231 = vunpack.c.h.b16 %v152
    %v232 = vunpack.c.l.b16 %v153
    %v233 = vunpack.c.h.b16 %v153
    %v234 = vunpack.c.l.b16 %v154
    %v235 = vunpack.c.h.b16 %v154
    %v236 = vunpack.c.l.b16 %v155
    %v237 = vunpack.c.h.b16 %v155
    %v238 = vunpack.c.l.b16 %v156
    %v239 = vunpack.c.h.b16 %v156
    %v240 = vunpack.c.l.b16 %v157
    %v241 = vunpack.c.h.b16 %v157
    %v242 = vunpack.c.l.b16 %v158
    %v243 = vunpack.c.h.b16 %v158
    %v244 = vunpack.c.l.b16 %v159
    %v245 = vunpack.c.h.b16 %v159
    %v246 = vunpack.c.l.b16 %v160
    %v247 = vunpack.c.h.b16 %v160
    %v248 = vunpack.c.l.b16 %v161
    %v249 = vunpack.c.h.b16 %v161
    %v250 = vunpack.c.l.b16 %v162
    %v251 = vunpack.c.h.b16 %v162
    %v252 = vunpack.c.l.b16 %v163
    %v253 = vunpack.c.h.b16 %v163
    %v254 = vunpack.c.l.b16 %v164
    %v255 = vunpack.c.h.b16 %v164
    %v256 = vunpack.c.l.b16 %v165
    %v257 = vunpack.c.h.b16 %v165
    %v258 = vunpack.c.l.b16 %v166
    %v259 = vunpack.c.h.b16 %v166
    %v260 = vunpack.c.l.b16 %v167
    %v261 = vunpack.c.h.b16 %v167
    %v262 = vunpack.c.l.b16 %v168
    %v263 = vunpack.c.h.b16 %v168
    %v264 = vunpack.c.l.b16 %v169
    %v265 = vunpack.c.h.b16 %v169
    %v266 = vunpack.c.l.b16 %v170
    %v267 = vunpack.c.h.b16 %v170
    %v268 = vunpack.c.l.b16 %v171
    %v269 = vunpack.c.h.b16 %v171
    %v270 = vunpack.c.l.b16 %v172
    %v271 = vunpack.c.h.b16 %v172
    %v272 = vunpack.c.l.b16 %v173
    %v273 = vunpack.c.h.b16 %v173
    %v274 = vunpack.c.l.b16 %v174
    %v275 = vunpack.c.h.b16 %v174
    %v276 = vunpack.c.l.b16 %v175
    %v277 = vunpack.c.h.b16 %v175
    %v278 = vunpack.c.l.b16 %v176
    %v279 = vunpack.c.h.b16 %v176
    %v280 = vunpack.c.l.b16 %v177
    %v281 = vunpack.c.h.b16 %v177
    %v282 = vunpack.c.l.b16 %v178
    %v283 = vunpack.c.h.b16 %v178
    %v284 = vunpack.c.l.b16 %v179
    %v285 = vunpack.c.h.b16 %v179
    %v286 = vunpack.c.l.b16 %v180
    %v287 = vunpack.c.h.b16 %v180
    %v288 = vunpack.c.l.b16 %v181
    %v289 = vunpack.c.h.b16 %v181
    %v290 = vpack.c.b16 %v228, %v226
    %v291 = vpack.c.b16 %v229, %v227
    %v292 = vpack.c.b16 %v232, %v230
    %v293 = vpack.c.b16 %v233, %v231
    %v294 = vpack.c.b16 %v236, %v234
    %v295 = vpack.c.b16 %v237, %v235
    %v296 = vpack.c.b16 %v240, %v238
    %v297 = vpack.c.b16 %v241, %v239
    %v298 = vpack.c.b16 %v244, %v242
    %v299 = vpack.c.b16 %v245, %v243
    %v300 = vpack.c.b16 %v248, %v246
    %v301 = vpack.c.b16 %v249, %v247
    %v302 = vpack.c.b16 %v252, %v250
    %v303 = vpack.c.b16 %v253, %v251
    %v304 = vpack.c.b16 %v256, %v254
    %v305 = vpack.c.b16 %v257, %v255
    %v306 = vpack.c.b16 %v260, %v258
    %v307 = vpack.c.b16 %v261, %v259
    %v308 = vpack.c.b16 %v264, %v262
    %v309 = vpack.c.b16 %v265, %v263
    %v310 = vpack.c.b16 %v268, %v266
    %v311 = vpack.c.b16 %v269, %v267
    %v312 = vpack.c.b16 %v272, %v270
    %v313 = vpack.c.b16 %v273, %v271
    %v314 = vpack.c.b16 %v276, %v274
    %v315 = vpack.c.b16 %v277, %v275
    %v316 = vpack.c.b16 %v280, %v278
    %v317 = vpack.c.b16 %v281, %v279
    %v318 = vpack.c.b16 %v284, %v282
    %v319 = vpack.c.b16 %v285, %v283
    %v320 = vpack.c.b16 %v288, %v286
    %v321 = vpack.c.b16 %v289, %v287
    %354 = vmatprep.subr.bf16.mxu0 %v291
    %355 = vmatpush1.bf16.msra.mxu0 %v290
    %356 = vmatprep.subr.bf16.mxu0 %v293
    %357 = vmatpush1.bf16.msra.mxu0 %v292
    %358 = vmatprep.subr.bf16.mxu0 %v295
    %359 = vmatpush1.bf16.msra.mxu0 %v294
    %360 = vmatprep.subr.bf16.mxu0 %v297
    %361 = vmatpush1.bf16.msra.mxu0 %v296
    %362 = vmatprep.subr.bf16.mxu0 %v299
    %363 = vmatpush1.bf16.msra.mxu0 %v298
    %364 = vmatprep.subr.bf16.mxu0 %v301
    %365 = vmatpush1.bf16.msra.mxu0 %v300
    %366 = vmatprep.subr.bf16.mxu0 %v303
    %367 = vmatpush1.bf16.msra.mxu0 %v302
    %368 = vmatprep.subr.bf16.mxu0 %v305
    %369 = vmatpush1.bf16.msra.mxu0 %v304
    %370 = vmatprep.subr.bf16.mxu0 %v307
    %371 = vmatpush1.bf16.msra.mxu0 %v306
    %372 = vmatprep.subr.bf16.mxu0 %v309
    %373 = vmatpush1.bf16.msra.mxu0 %v308
    %374 = vmatprep.subr.bf16.mxu0 %v311
    %375 = vmatpush1.bf16.msra.mxu0 %v310
    %376 = vmatprep.subr.bf16.mxu0 %v313
    %377 = vmatpush1.bf16.msra.mxu0 %v312
    %378 = vmatprep.subr.bf16.mxu0 %v315
    %379 = vmatpush1.bf16.msra.mxu0 %v314
    %380 = vmatprep.subr.bf16.mxu0 %v317
    %381 = vmatpush1.bf16.msra.mxu0 %v316
    %382 = vmatprep.subr.bf16.mxu0 %v319
    %383 = vmatpush1.bf16.msra.mxu0 %v318
    %384 = vmatprep.subr.bf16.mxu0 %v321
    %385 = vmatpush1.bf16.msra.mxu0 %v320
    %386 = vmatprep.mubr.bf16.mxu0 %v149
    %387 = vmatmul.mubr.bf16.gmra.mrb[0].mxu0 %v148
    %v388 = vpop.f32.mrb[0].mxu0
    %v389 = vadd.f32 %v187, %v388
    %v390 = vpop.f32.mrb[0].mxu0
    %v391 = vadd.f32 %v191, %v390
    %v392 = vpop.f32.mrb[0].mxu0
    %v393 = vpop.f32.mrb[0].mxu0
    %394 = vdwg.mxu0
    %v395 = vxor.u32 %v389, 2147483648
    %v396 = vxor.u32 %v391, 2147483648
    %v397 = vmul.f32 %v395, 1.442695
    %v398 = vpow.pop %v397
    %v399 = vmul.f32 %v396, 1.442695
    %v400 = vpow.pop %v399
    %v401 = vadd.f32 %v398, 1.0
    %v402 = vadd.f32 %v400, 1.0
    %v403 = vrcp.pop %v401
    %v404 = vmul.f32 1.0, %v403
    %v405 = vrcp.pop %v402
    %v406 = vmul.f32 1.0, %v405
    %v407 = vmul.f32 %v389, %v404
    %v408 = vmul.f32 %v391, %v406
    %v409 = vpack.c.bf16 %v407, %v407
    %v410 = vpack.c.bf16 %v408, %v408
    %v411 = vld [vmem:[#allocation5] sm:$0xff]
    %v412 = vld [vmem:[#allocation5 + $0x8] sm:$0xff]
    %v413 = vld [vmem:[#allocation5 + $0x10] sm:$0xff]
    %v414 = vld [vmem:[#allocation5 + $0x18] sm:$0xff]
    %v415 = vld [vmem:[#allocation5 + $0x20] sm:$0xff]
    %v416 = vld [vmem:[#allocation5 + $0x28] sm:$0xff]
    %v417 = vld [vmem:[#allocation5 + $0x30] sm:$0xff]
    %v418 = vld [vmem:[#allocation5 + $0x38] sm:$0xff]
    %v419 = vld [vmem:[#allocation5 + $0x40] sm:$0xff]
    %v420 = vld [vmem:[#allocation5 + $0x48] sm:$0xff]
    %v421 = vld [vmem:[#allocation5 + $0x50] sm:$0xff]
    %v422 = vld [vmem:[#allocation5 + $0x58] sm:$0xff]
    %v423 = vld [vmem:[#allocation5 + $0x60] sm:$0xff]
    %v424 = vld [vmem:[#allocation5 + $0x68] sm:$0xff]
    %v425 = vld [vmem:[#allocation5 + $0x70] sm:$0xff]
    %v426 = vld [vmem:[#allocation5 + $0x78] sm:$0xff]
    %v427 = vld [vmem:[#allocation5 + $0x80] sm:$0xff]
    %v428 = vld [vmem:[#allocation5 + $0x88] sm:$0xff]
    %v429 = vld [vmem:[#allocation5 + $0x90] sm:$0xff]
    %v430 = vld [vmem:[#allocation5 + $0x98] sm:$0xff]
    %v431 = vld [vmem:[#allocation5 + $0xa0] sm:$0xff]
    %v432 = vld [vmem:[#allocation5 + $0xa8] sm:$0xff]
    %v433 = vld [vmem:[#allocation5 + $0xb0] sm:$0xff]
    %v434 = vld [vmem:[#allocation5 + $0xb8] sm:$0xff]
    %v435 = vld [vmem:[#allocation5 + $0xc0] sm:$0xff]
    %v436 = vld [vmem:[#allocation5 + $0xc8] sm:$0xff]
    %v437 = vld [vmem:[#allocation5 + $0xd0] sm:$0xff]
    %v438 = vld [vmem:[#allocation5 + $0xd8] sm:$0xff]
    %v439 = vld [vmem:[#allocation5 + $0xe0] sm:$0xff]
    %v440 = vld [vmem:[#allocation5 + $0xe8] sm:$0xff]
    %v441 = vld [vmem:[#allocation5 + $0xf0] sm:$0xff]
    %v442 = vld [vmem:[#allocation5 + $0xf8] sm:$0xff]
    %v443 = vld [vmem:[%s6] sm:$0x3]
    %v445 = vlaneseq
    %v446 = vshrl.u32 %v445, 7
    %v447 = vsub.s32 0, %v446
    %v448 = vrot.slane %v443, %v447
    %v449 = vlaneseq
    %v450 = vshrl.u32 %v449, 7
    %v451 = vsub.s32 1, %v450
    %v452 = vrot.slane %v443, %v451
    %v487 = vunpack.c.l.b16 %v411
    %v488 = vunpack.c.h.b16 %v411
    %v489 = vunpack.c.l.b16 %v412
    %v490 = vunpack.c.h.b16 %v412
    %v491 = vunpack.c.l.b16 %v413
    %v492 = vunpack.c.h.b16 %v413
    %v493 = vunpack.c.l.b16 %v414
    %v494 = vunpack.c.h.b16 %v414
    %v495 = vunpack.c.l.b16 %v415
    %v496 = vunpack.c.h.b16 %v415
    %v497 = vunpack.c.l.b16 %v416
    %v498 = vunpack.c.h.b16 %v416
    %v499 = vunpack.c.l.b16 %v417
    %v500 = vunpack.c.h.b16 %v417
    %v501 = vunpack.c.l.b16 %v418
    %v502 = vunpack.c.h.b16 %v418
    %v503 = vunpack.c.l.b16 %v419
    %v504 = vunpack.c.h.b16 %v419
    %v505 = vunpack.c.l.b16 %v420
    %v506 = vunpack.c.h.b16 %v420
    %v507 = vunpack.c.l.b16 %v421
    %v508 = vunpack.c.h.b16 %v421
    %v509 = vunpack.c.l.b16 %v422
    %v510 = vunpack.c.h.b16 %v422
    %v511 = vunpack.c.l.b16 %v423
    %v512 = vunpack.c.h.b16 %v423
    %v513 = vunpack.c.l.b16 %v424
    %v514 = vunpack.c.h.b16 %v424
    %v515 = vunpack.c.l.b16 %v425
    %v516 = vunpack.c.h.b16 %v425
    %v517 = vunpack.c.l.b16 %v426
    %v518 = vunpack.c.h.b16 %v426
    %v519 = vunpack.c.l.b16 %v427
    %v520 = vunpack.c.h.b16 %v427
    %v521 = vunpack.c.l.b16 %v428
    %v522 = vunpack.c.h.b16 %v428
    %v523 = vunpack.c.l.b16 %v429
    %v524 = vunpack.c.h.b16 %v429
    %v525 = vunpack.c.l.b16 %v430
    %v526 = vunpack.c.h.b16 %v430
    %v527 = vunpack.c.l.b16 %v431
    %v528 = vunpack.c.h.b16 %v431
    %v529 = vunpack.c.l.b16 %v432
    %v530 = vunpack.c.h.b16 %v432
    %v531 = vunpack.c.l.b16 %v433
    %v532 = vunpack.c.h.b16 %v433
    %v533 = vunpack.c.l.b16 %v434
    %v534 = vunpack.c.h.b16 %v434
    %v535 = vunpack.c.l.b16 %v435
    %v536 = vunpack.c.h.b16 %v435
    %v537 = vunpack.c.l.b16 %v436
    %v538 = vunpack.c.h.b16 %v436
    %v539 = vunpack.c.l.b16 %v437
    %v540 = vunpack.c.h.b16 %v437
    %v541 = vunpack.c.l.b16 %v438
    %v542 = vunpack.c.h.b16 %v438
    %v543 = vunpack.c.l.b16 %v439
    %v544 = vunpack.c.h.b16 %v439
    %v545 = vunpack.c.l.b16 %v440
    %v546 = vunpack.c.h.b16 %v440
    %v547 = vunpack.c.l.b16 %v441
    %v548 = vunpack.c.h.b16 %v441
    %v549 = vunpack.c.l.b16 %v442
    %v550 = vunpack.c.h.b16 %v442
    %v551 = vpack.c.b16 %v489, %v487
    %v552 = vpack.c.b16 %v490, %v488
    %v553 = vpack.c.b16 %v493, %v491
    %v554 = vpack.c.b16 %v494, %v492
    %v555 = vpack.c.b16 %v497, %v495
    %v556 = vpack.c.b16 %v498, %v496
    %v557 = vpack.c.b16 %v501, %v499
    %v558 = vpack.c.b16 %v502, %v500
    %v559 = vpack.c.b16 %v505, %v503
    %v560 = vpack.c.b16 %v506, %v504
    %v561 = vpack.c.b16 %v509, %v507
    %v562 = vpack.c.b16 %v510, %v508
    %v563 = vpack.c.b16 %v513, %v511
    %v564 = vpack.c.b16 %v514, %v512
    %v565 = vpack.c.b16 %v517, %v515
    %v566 = vpack.c.b16 %v518, %v516
    %v567 = vpack.c.b16 %v521, %v519
    %v568 = vpack.c.b16 %v522, %v520
    %v569 = vpack.c.b16 %v525, %v523
    %v570 = vpack.c.b16 %v526, %v524
    %v571 = vpack.c.b16 %v529, %v527
    %v572 = vpack.c.b16 %v530, %v528
    %v573 = vpack.c.b16 %v533, %v531
    %v574 = vpack.c.b16 %v534, %v532
    %v575 = vpack.c.b16 %v537, %v535
    %v576 = vpack.c.b16 %v538, %v536
    %v577 = vpack.c.b16 %v541, %v539
    %v578 = vpack.c.b16 %v542, %v540
    %v579 = vpack.c.b16 %v545, %v543
    %v580 = vpack.c.b16 %v546, %v544
    %v581 = vpack.c.b16 %v549, %v547
    %v582 = vpack.c.b16 %v550, %v548
    %615 = vmatprep.subr.bf16.mxu0 %v552
    %616 = vmatpush1.bf16.msra.mxu0 %v551
    %617 = vmatprep.subr.bf16.mxu0 %v554
    %618 = vmatpush1.bf16.msra.mxu0 %v553
    %619 = vmatprep.subr.bf16.mxu0 %v556
    %620 = vmatpush1.bf16.msra.mxu0 %v555
    %621 = vmatprep.subr.bf16.mxu0 %v558
    %622 = vmatpush1.bf16.msra.mxu0 %v557
    %623 = vmatprep.subr.bf16.mxu0 %v560
    %624 = vmatpush1.bf16.msra.mxu0 %v559
    %625 = vmatprep.subr.bf16.mxu0 %v562
    %626 = vmatpush1.bf16.msra.mxu0 %v561
    %627 = vmatprep.subr.bf16.mxu0 %v564
    %628 = vmatpush1.bf16.msra.mxu0 %v563
    %629 = vmatprep.subr.bf16.mxu0 %v566
    %630 = vmatpush1.bf16.msra.mxu0 %v565
    %631 = vmatprep.subr.bf16.mxu0 %v568
    %632 = vmatpush1.bf16.msra.mxu0 %v567
    %633 = vmatprep.subr.bf16.mxu0 %v570
    %634 = vmatpush1.bf16.msra.mxu0 %v569
    %635 = vmatprep.subr.bf16.mxu0 %v572
    %636 = vmatpush1.bf16.msra.mxu0 %v571
    %637 = vmatprep.subr.bf16.mxu0 %v574
    %638 = vmatpush1.bf16.msra.mxu0 %v573
    %639 = vmatprep.subr.bf16.mxu0 %v576
    %640 = vmatpush1.bf16.msra.mxu0 %v575
    %641 = vmatprep.subr.bf16.mxu0 %v578
    %642 = vmatpush1.bf16.msra.mxu0 %v577
    %643 = vmatprep.subr.bf16.mxu0 %v580
    %644 = vmatpush1.bf16.msra.mxu0 %v579
    %645 = vmatprep.subr.bf16.mxu0 %v582
    %646 = vmatpush1.bf16.msra.mxu0 %v581
    %647 = vmatprep.mubr.bf16.mxu0 %v410
    %648 = vmatmul.mubr.bf16.gmra.mrb[0].mxu0 %v409
    %v649 = vpop.f32.mrb[0].mxu0
    %v650 = vadd.f32 %v448, %v649
    %v651 = vpop.f32.mrb[0].mxu0
    %v652 = vadd.f32 %v452, %v651
    %v653 = vpop.f32.mrb[0].mxu0
    %v654 = vpop.f32.mrb[0].mxu0
    %655 = vdwg.mxu0
    %v656 = vxor.u32 %v650, 2147483648
    %v657 = vxor.u32 %v652, 2147483648
    %v658 = vmul.f32 %v656, 1.442695
    %v659 = vpow.pop %v658
    %v660 = vmul.f32 %v657, 1.442695
    %v661 = vpow.pop %v660
    %v662 = vadd.f32 %v659, 1.0
    %v663 = vadd.f32 %v661, 1.0
    %v664 = vrcp.pop %v662
    %v665 = vmul.f32 1.0, %v664
    %v666 = vrcp.pop %v663
    %v667 = vmul.f32 1.0, %v666
    %v668 = vmul.f32 %v650, %v665
    %v669 = vmul.f32 %v652, %v667
    %v670 = vpack.c.bf16 %v668, %v668
    %v671 = vpack.c.bf16 %v669, %v669
    %v672 = vld [vmem:[%s7] sm:$0xf]
    %v673 = vld [vmem:[%s7 + $0x4] sm:$0xf]
    %v674 = vld [vmem:[%s7 + $0x8] sm:$0xf]
    %v675 = vld [vmem:[%s7 + $0xc] sm:$0xf]
    %v676 = vld [vmem:[%s7 + $0x10] sm:$0xf]
    %v677 = vld [vmem:[%s7 + $0x14] sm:$0xf]
    %v678 = vld [vmem:[%s7 + $0x18] sm:$0xf]
    %v679 = vld [vmem:[%s7 + $0x1c] sm:$0xf]
    %v680 = vld [vmem:[%s7 + $0x20] sm:$0xf]
    %v681 = vld [vmem:[%s7 + $0x24] sm:$0xf]
    %v682 = vld [vmem:[%s7 + $0x28] sm:$0xf]
    %v683 = vld [vmem:[%s7 + $0x2c] sm:$0xf]
    %v684 = vld [vmem:[%s7 + $0x30] sm:$0xf]
    %v685 = vld [vmem:[%s7 + $0x34] sm:$0xf]
    %v686 = vld [vmem:[%s7 + $0x38] sm:$0xf]
    %v687 = vld [vmem:[%s7 + $0x3c] sm:$0xf]
    %v688 = vld [vmem:[%s7 + $0x40] sm:$0xf]
    %v689 = vld [vmem:[%s7 + $0x44] sm:$0xf]
    %v690 = vld [vmem:[%s7 + $0x48] sm:$0xf]
    %v691 = vld [vmem:[%s7 + $0x4c] sm:$0xf]
    %v692 = vld [vmem:[%s7 + $0x50] sm:$0xf]
    %v693 = vld [vmem:[%s7 + $0x54] sm:$0xf]
    %v694 = vld [vmem:[%s7 + $0x58] sm:$0xf]
    %v695 = vld [vmem:[%s7 + $0x5c] sm:$0xf]
    %v696 = vld [vmem:[%s7 + $0x60] sm:$0xf]
    %v697 = vld [vmem:[%s7 + $0x64] sm:$0xf]
    %v698 = vld [vmem:[%s7 + $0x68] sm:$0xf]
    %v699 = vld [vmem:[%s7 + $0x6c] sm:$0xf]
    %v700 = vld [vmem:[%s7 + $0x70] sm:$0xf]
    %v701 = vld [vmem:[%s7 + $0x74] sm:$0xf]
    %v702 = vld [vmem:[%s7 + $0x78] sm:$0xf]
    %v703 = vld [vmem:[%s7 + $0x7c] sm:$0xf]
    %v704 = vld [vmem:[%s8] sm:$0x1]
    %v706 = vlaneseq
    %v707 = vshrl.u32 %v706, 7
    %v708 = vsub.s32 0, %v707
    %v709 = vrot.slane %v704, %v708
    %v743 = vunpack.c.l.b16 %v672
    %v744 = vunpack.c.l.b16 %v673
    %v745 = vunpack.c.l.b16 %v674
    %v746 = vunpack.c.l.b16 %v675
    %v747 = vunpack.c.l.b16 %v676
    %v748 = vunpack.c.l.b16 %v677
    %v749 = vunpack.c.l.b16 %v678
    %v750 = vunpack.c.l.b16 %v679
    %v751 = vunpack.c.l.b16 %v680
    %v752 = vunpack.c.l.b16 %v681
    %v753 = vunpack.c.l.b16 %v682
    %v754 = vunpack.c.l.b16 %v683
    %v755 = vunpack.c.l.b16 %v684
    %v756 = vunpack.c.l.b16 %v685
    %v757 = vunpack.c.l.b16 %v686
    %v758 = vunpack.c.l.b16 %v687
    %v759 = vunpack.c.l.b16 %v688
    %v760 = vunpack.c.l.b16 %v689
    %v761 = vunpack.c.l.b16 %v690
    %v762 = vunpack.c.l.b16 %v691
    %v763 = vunpack.c.l.b16 %v692
    %v764 = vunpack.c.l.b16 %v693
    %v765 = vunpack.c.l.b16 %v694
    %v766 = vunpack.c.l.b16 %v695
    %v767 = vunpack.c.l.b16 %v696
    %v768 = vunpack.c.l.b16 %v697
    %v769 = vunpack.c.l.b16 %v698
    %v770 = vunpack.c.l.b16 %v699
    %v771 = vunpack.c.l.b16 %v700
    %v772 = vunpack.c.l.b16 %v701
    %v773 = vunpack.c.l.b16 %v702
    %v774 = vunpack.c.l.b16 %v703
    %v775 = vpack.c.b16 %v744, %v743
    %v776 = vpack.c.b16 %v746, %v745
    %v777 = vpack.c.b16 %v748, %v747
    %v778 = vpack.c.b16 %v750, %v749
    %v779 = vpack.c.b16 %v752, %v751
    %v780 = vpack.c.b16 %v754, %v753
    %v781 = vpack.c.b16 %v756, %v755
    %v782 = vpack.c.b16 %v758, %v757
    %v783 = vpack.c.b16 %v760, %v759
    %v784 = vpack.c.b16 %v762, %v761
    %v785 = vpack.c.b16 %v764, %v763
    %v786 = vpack.c.b16 %v766, %v765
    %v787 = vpack.c.b16 %v768, %v767
    %v788 = vpack.c.b16 %v770, %v769
    %v789 = vpack.c.b16 %v772, %v771
    %v790 = vpack.c.b16 %v774, %v773
    %807 = vmatprep.subr.bf16.mxu0 0
    %808 = vmatpush1.bf16.msra.mxu0 %v775
    %809 = vmatprep.subr.bf16.mxu0 0
    %810 = vmatpush1.bf16.msra.mxu0 %v776
    %811 = vmatprep.subr.bf16.mxu0 0
    %812 = vmatpush1.bf16.msra.mxu0 %v777
    %813 = vmatprep.subr.bf16.mxu0 0
    %814 = vmatpush1.bf16.msra.mxu0 %v778
    %815 = vmatprep.subr.bf16.mxu0 0
    %816 = vmatpush1.bf16.msra.mxu0 %v779
    %817 = vmatprep.subr.bf16.mxu0 0
    %818 = vmatpush1.bf16.msra.mxu0 %v780
    %819 = vmatprep.subr.bf16.mxu0 0
    %820 = vmatpush1.bf16.msra.mxu0 %v781
    %821 = vmatprep.subr.bf16.mxu0 0
    %822 = vmatpush1.bf16.msra.mxu0 %v782
    %823 = vmatprep.subr.bf16.mxu0 0
    %824 = vmatpush1.bf16.msra.mxu0 %v783
    %825 = vmatprep.subr.bf16.mxu0 0
    %826 = vmatpush1.bf16.msra.mxu0 %v784
    %827 = vmatprep.subr.bf16.mxu0 0
    %828 = vmatpush1.bf16.msra.mxu0 %v785
    %829 = vmatprep.subr.bf16.mxu0 0
    %830 = vmatpush1.bf16.msra.mxu0 %v786
    %831 = vmatprep.subr.bf16.mxu0 0
    %832 = vmatpush1.bf16.msra.mxu0 %v787
    %833 = vmatprep.subr.bf16.mxu0 0
    %834 = vmatpush1.bf16.msra.mxu0 %v788
    %835 = vmatprep.subr.bf16.mxu0 0
    %836 = vmatpush1.bf16.msra.mxu0 %v789
    %837 = vmatprep.subr.bf16.mxu0 0
    %838 = vmatpush1.bf16.msra.mxu0 %v790
    %839 = vmatprep.mubr.bf16.mxu0 %v671
    %840 = vmatmul.mubr.bf16.gmra.mrb[0].mxu0 %v670
    %v841 = vpop.f32.mrb[0].mxu0
    %v842 = vadd.f32 %v709, %v841
    %v843 = vpop.f32.mrb[0].mxu0
    %v844 = vpop.f32.mrb[0].mxu0
    %v845 = vpop.f32.mrb[0].mxu0
    %846 = vdwg.mxu0
    %v847 = vxor.u32 %v842, 2147483648
    %v848 = vmul.f32 %v847, 1.442695
    %v849 = vpow.pop %v848
    %v850 = vadd.f32 %v849, 1.0
    %v851 = vrcp.pop %v850
    %v852 = vmul.f32 1.0, %v851
    %853 = vst.msk [vmem:[#allocation7] sm:$0xff] %vm82, %v852
    // Predicated region
    $region46: #{tpu_custom_call.1} parent=1 // pred_check
      _
    $region47: #{tpu_custom_call.1} parent=1 // pred_check_branch
      %855 = sbr.rel (0) target = $region49
    $region48: #{tpu_custom_call.1} parent=1 // pred_region
      %s857 = ssub.s32 128, 128
      %858 = vsyncadd [#allocation4], %s857
      %s860 = sshll.u32 [#allocation7], 4
      %s861 = int_to_ptr.vmem [resolvable:$true] %s860
      %863 = dma.vmem_to_hbm [thread:$0]  %s861, 128, %s9, [#allocation4]
    $region49: #{tpu_custom_call.1} parent=1 // pred_fallthru
      _
    // Predicated region
    $region50: #{tpu_custom_call.1} parent=1 // pred_check
      _
    $region51: #{tpu_custom_call.1} parent=1 // pred_check_branch
      %865 = sbr.rel (0) target = $region53
    $region52: #{tpu_custom_call.1} parent=1 // pred_region
      %866 = dma.done [#allocation4], 128
    $region53: #{tpu_custom_call.1} parent=1 // pred_fallthru
      _
    %867 = vsyncpa [#allocation3], 1
    %868 = vsyncpa [#allocation6], 1
    %869 = vsyncpa [#allocation4], 1

</llo_original>
